<compile_context>
chip_gen: v5e
topology: v5e:2x2
jax: 0.10.0
libtpu: 0.0.40
codegen_flags: <defaults>
</compile_context>

<pallas_src>
import functools

import jax
import jax.numpy as jnp
from jax.experimental import pallas as pl
from jax.experimental.pallas import tpu as pltpu

LANE = 128      # vreg lane width (last dim)
SUBLANE = 8     # vreg sublane width (second-to-last dim)


def _round_up(x: int, m: int) -> int:
    return (x + m - 1) // m * m


def mlp_kernel(x_ref,
               w0_ref, b0_ref,
               w1_ref, b1_ref,
               w2_ref, b2_ref,
               w3_ref, b3_ref,
               out_ref):
    """One batch tile of the whole MLP forward.  All shapes are (8,128)-padded.

    Padded lanes/rows are zero everywhere (weights, biases, inputs), so they
    contribute zero to every dot product and ReLU keeps them at zero; the
    wrapper slices the valid logits back out.
    """
    x = x_ref[...]

    # Bias reads hoisted once per tile (no inner loop, but keeps them single
    # broadcasts if the body is ever restructured with a sub-tile loop).
    b0 = b0_ref[...]
    b1 = b1_ref[...]
    b2 = b2_ref[...]
    b3 = b3_ref[...]

    # Layer 0: Linear(input_dim, hidden) + ReLU
    h = jnp.dot(x, w0_ref[...], preferred_element_type=jnp.float32) + b0
    h = jnp.maximum(h, 0.0)

    # Hidden block 1: Linear(hidden, hidden) + Dropout(eval: identity) + ReLU
    h = jnp.dot(h, w1_ref[...], preferred_element_type=jnp.float32) + b1
    h = jnp.maximum(h, 0.0)

    # Hidden block 2: Linear(hidden, hidden) + Dropout(eval: identity) + ReLU
    h = jnp.dot(h, w2_ref[...], preferred_element_type=jnp.float32) + b2
    h = jnp.maximum(h, 0.0)

    # Output layer: Linear(hidden, n_classes)  (logits, no activation)
    out_ref[...] = (jnp.dot(h, w3_ref[...], preferred_element_type=jnp.float32)
                    + b3).astype(out_ref.dtype)


@functools.partial(jax.jit, static_argnames=("batch_tile",))
def mlp_forward(x, params, *, batch_tile=256):
    """params = ((w0,b0), (w1,b1), (w2,b2), (w3,b3)); weights are [in, out]."""
    (w0, b0), (w1, b1), (w2, b2), (w3, b3) = params

    batch, in_dim = x.shape
    hidden = w0.shape[1]
    n_classes = w3.shape[1]

    # Padded (lane/sublane-aligned) dims.
    in_p = _round_up(in_dim, LANE)        # 108 -> 128
    h_p = _round_up(hidden, LANE)         # 50  -> 128
    out_p = _round_up(n_classes, LANE)    # 2   -> 128

    # Batch tiling: pad batch to a sublane multiple, then to a multiple of the
    # chosen tile.  Small batches collapse to a single tile; large batches get
    # a pipelined, megacore-shardable grid.
    pb = _round_up(batch, SUBLANE)
    tb = min(batch_tile, pb)
    pb = _round_up(pb, tb)
    grid = (pb // tb,)

    def pad2(a, rows, cols):
        return jnp.pad(a, ((0, rows - a.shape[0]), (0, cols - a.shape[1])))

    xp = pad2(x.astype(jnp.float32), pb, in_p)
    w0p, b0p = pad2(w0, in_p, h_p), pad2(b0, 1, h_p)
    w1p, b1p = pad2(w1, h_p, h_p), pad2(b1, 1, h_p)
    w2p, b2p = pad2(w2, h_p, h_p), pad2(b2, 1, h_p)
    w3p, b3p = pad2(w3, h_p, out_p), pad2(b3, 1, out_p)

    def resident(shape):
        # Weights/biases: same block for every grid step -> stay in VMEM.
        return pl.BlockSpec(shape, lambda i: (0, 0))

    # Advisory cost estimate for XLA's scheduler around the custom call.
    flops = 2 * pb * (in_p * h_p + 2 * h_p * h_p + h_p * out_p)
    bytes_accessed = 4 * (xp.size + w0p.size + b0p.size + w1p.size + b1p.size
                          + w2p.size + b2p.size + w3p.size + b3p.size
                          + pb * out_p)

    out_padded = pl.pallas_call(
        mlp_kernel,
        out_shape=jax.ShapeDtypeStruct((pb, out_p), jnp.float32),
        grid=grid,
        in_specs=[
            pl.BlockSpec((tb, in_p), lambda i: (i, 0)),     # x: blocked on batch
            resident((in_p, h_p)), resident((1, h_p)),      # w0, b0
            resident((h_p, h_p)), resident((1, h_p)),       # w1, b1
            resident((h_p, h_p)), resident((1, h_p)),       # w2, b2
            resident((h_p, out_p)), resident((1, out_p)),   # w3, b3
        ],
        out_specs=pl.BlockSpec((tb, out_p), lambda i: (i, 0)),
        compiler_params=pltpu.CompilerParams(
            dimension_semantics=("parallel",),
            vmem_limit_bytes=32 * 1024 * 1024,
        ),
        cost_estimate=pl.CostEstimate(
            flops=flops, transcendentals=0, bytes_accessed=bytes_accessed),
    )(xp, w0p, b0p, w1p, b1p, w2p, b2p, w3p, b3p)

    # Strip batch / class padding.
    return out_padded[:batch, :n_classes]


def init_params(key, input_dim, hidden_dim, n_classes):
    """Deterministic synthetic parameters (shapes match build_mlp defaults)."""
    dims = [(input_dim, hidden_dim),
            (hidden_dim, hidden_dim),
            (hidden_dim, hidden_dim),
            (hidden_dim, n_classes)]
    params = []
    for (d_in, d_out) in dims:
        key, kw, kb = jax.random.split(key, 3)
        bound = 1.0 / jnp.sqrt(d_in)
        w = jax.random.uniform(kw, (d_in, d_out), jnp.float32, -bound, bound)
        b = jax.random.uniform(kb, (1, d_out), jnp.float32, -bound, bound)
        params.append((w, b))
    return tuple(params)


def mlp_reference(x, params):
    """Pure-JAX reference for correctness check (eval-mode dropout = id)."""
    (w0, b0), (w1, b1), (w2, b2), (w3, b3) = params
    h = jnp.maximum(x @ w0 + b0, 0.0)
    h = jnp.maximum(h @ w1 + b1, 0.0)
    h = jnp.maximum(h @ w2 + b2, 0.0)
    return h @ w3 + b3


if __name__ == "__main__":
    # Small shapes consistent with the module defaults:
    # input_dim=108, hidden_dim=50, n_layers=2 hidden blocks, n_classes=2.
    batch = 8
    input_dim = 108
    hidden_dim = 50
    n_classes = 2

    key = jax.random.PRNGKey(0)
    key, kx = jax.random.split(key)
    x = jax.random.normal(kx, (batch, input_dim), jnp.float32)
    params = init_params(key, input_dim, hidden_dim, n_classes)

    out = mlp_forward(x, params)
    out = jax.block_until_ready(out)

    ref = mlp_reference(x, params)
    assert out.shape == (batch, n_classes), out.shape
    assert jnp.allclose(out, ref, atol=1e-4, rtol=1e-4), \
        f"max abs err {jnp.max(jnp.abs(out - ref))}"

    print("KERNEL_OK")
</pallas_src>

<mosaic_0001>
module attributes {stable_mosaic.version = 11 : i64} {
  func.func @mlp_kernel(%arg0: i32, %arg1: memref<8x128xf32, #tpu.memory_space<vmem>>, %arg2: memref<128x128xf32, #tpu.memory_space<vmem>>, %arg3: memref<1x128xf32, #tpu.memory_space<vmem>>, %arg4: memref<128x128xf32, #tpu.memory_space<vmem>>, %arg5: memref<1x128xf32, #tpu.memory_space<vmem>>, %arg6: memref<128x128xf32, #tpu.memory_space<vmem>>, %arg7: memref<1x128xf32, #tpu.memory_space<vmem>>, %arg8: memref<128x128xf32, #tpu.memory_space<vmem>>, %arg9: memref<1x128xf32, #tpu.memory_space<vmem>>, %arg10: memref<8x128xf32, #tpu.memory_space<vmem>>) attributes {dimension_semantics = [#tpu.dimension_semantics<parallel>], iteration_bounds = array<i64: 1>, scalar_prefetch = 0 : i64, scratch_operands = 0 : i64, tpu.core_type = #tpu.core_type<tc>, window_params = [{transform_indices = @transform_0, window_bounds = array<i64: 8, 128>}, {pipeline_mode = #tpu.pipeline_mode<synchronous>, transform_indices = @transform_1, window_bounds = array<i64: 128, 128>}, {pipeline_mode = #tpu.pipeline_mode<synchronous>, transform_indices = @transform_2, window_bounds = array<i64: 1, 128>}, {pipeline_mode = #tpu.pipeline_mode<synchronous>, transform_indices = @transform_3, window_bounds = array<i64: 128, 128>}, {pipeline_mode = #tpu.pipeline_mode<synchronous>, transform_indices = @transform_4, window_bounds = array<i64: 1, 128>}, {pipeline_mode = #tpu.pipeline_mode<synchronous>, transform_indices = @transform_5, window_bounds = array<i64: 128, 128>}, {pipeline_mode = #tpu.pipeline_mode<synchronous>, transform_indices = @transform_6, window_bounds = array<i64: 1, 128>}, {pipeline_mode = #tpu.pipeline_mode<synchronous>, transform_indices = @transform_7, window_bounds = array<i64: 128, 128>}, {pipeline_mode = #tpu.pipeline_mode<synchronous>, transform_indices = @transform_8, window_bounds = array<i64: 1, 128>}, {transform_indices = @transform_9, window_bounds = array<i64: 8, 128>}]} {
    %c0 = arith.constant 0 : index
    %c0_0 = arith.constant 0 : index
    %0 = vector.load %arg1[%c0, %c0_0] : memref<8x128xf32, #tpu.memory_space<vmem>>, vector<8x128xf32>
    %c0_1 = arith.constant 0 : index
    %c0_2 = arith.constant 0 : index
    %1 = vector.load %arg3[%c0_1, %c0_2] : memref<1x128xf32, #tpu.memory_space<vmem>>, vector<1x128xf32>
    %c0_3 = arith.constant 0 : index
    %c0_4 = arith.constant 0 : index
    %2 = vector.load %arg5[%c0_3, %c0_4] : memref<1x128xf32, #tpu.memory_space<vmem>>, vector<1x128xf32>
    %c0_5 = arith.constant 0 : index
    %c0_6 = arith.constant 0 : index
    %3 = vector.load %arg7[%c0_5, %c0_6] : memref<1x128xf32, #tpu.memory_space<vmem>>, vector<1x128xf32>
    %c0_7 = arith.constant 0 : index
    %c0_8 = arith.constant 0 : index
    %4 = vector.load %arg9[%c0_7, %c0_8] : memref<1x128xf32, #tpu.memory_space<vmem>>, vector<1x128xf32>
    %c0_9 = arith.constant 0 : index
    %c0_10 = arith.constant 0 : index
    %5 = vector.load %arg2[%c0_9, %c0_10] : memref<128x128xf32, #tpu.memory_space<vmem>>, vector<128x128xf32>
    %cst = arith.constant dense<0.000000e+00> : vector<8x128xf32>
    %6 = tpu.matmul %0, %5, %cst {dimension_numbers = #tpu.dot_dimension_numbers<[1], [0], [0], [1], [0, 0, 1, 1], [], []>} : vector<8x128xf32>, vector<128x128xf32>, vector<8x128xf32> -> vector<8x128xf32>
    %7 = vector.broadcast %1 : vector<1x128xf32> to vector<8x128xf32>
    %8 = arith.addf %6, %7 : vector<8x128xf32>
    %cst_11 = arith.constant 0.000000e+00 : f32
    %9 = vector.broadcast %cst_11 : f32 to vector<8x128xf32>
    %10 = arith.maximumf %8, %9 : vector<8x128xf32>
    %c0_12 = arith.constant 0 : index
    %c0_13 = arith.constant 0 : index
    %11 = vector.load %arg4[%c0_12, %c0_13] : memref<128x128xf32, #tpu.memory_space<vmem>>, vector<128x128xf32>
    %cst_14 = arith.constant dense<0.000000e+00> : vector<8x128xf32>
    %12 = tpu.matmul %10, %11, %cst_14 {dimension_numbers = #tpu.dot_dimension_numbers<[1], [0], [0], [1], [0, 0, 1, 1], [], []>} : vector<8x128xf32>, vector<128x128xf32>, vector<8x128xf32> -> vector<8x128xf32>
    %13 = vector.broadcast %2 : vector<1x128xf32> to vector<8x128xf32>
    %14 = arith.addf %12, %13 : vector<8x128xf32>
    %cst_15 = arith.constant 0.000000e+00 : f32
    %15 = vector.broadcast %cst_15 : f32 to vector<8x128xf32>
    %16 = arith.maximumf %14, %15 : vector<8x128xf32>
    %c0_16 = arith.constant 0 : index
    %c0_17 = arith.constant 0 : index
    %17 = vector.load %arg6[%c0_16, %c0_17] : memref<128x128xf32, #tpu.memory_space<vmem>>, vector<128x128xf32>
    %cst_18 = arith.constant dense<0.000000e+00> : vector<8x128xf32>
    %18 = tpu.matmul %16, %17, %cst_18 {dimension_numbers = #tpu.dot_dimension_numbers<[1], [0], [0], [1], [0, 0, 1, 1], [], []>} : vector<8x128xf32>, vector<128x128xf32>, vector<8x128xf32> -> vector<8x128xf32>
    %19 = vector.broadcast %3 : vector<1x128xf32> to vector<8x128xf32>
    %20 = arith.addf %18, %19 : vector<8x128xf32>
    %cst_19 = arith.constant 0.000000e+00 : f32
    %21 = vector.broadcast %cst_19 : f32 to vector<8x128xf32>
    %22 = arith.maximumf %20, %21 : vector<8x128xf32>
    %c0_20 = arith.constant 0 : index
    %c0_21 = arith.constant 0 : index
    %23 = vector.load %arg8[%c0_20, %c0_21] : memref<128x128xf32, #tpu.memory_space<vmem>>, vector<128x128xf32>
    %cst_22 = arith.constant dense<0.000000e+00> : vector<8x128xf32>
    %24 = tpu.matmul %22, %23, %cst_22 {dimension_numbers = #tpu.dot_dimension_numbers<[1], [0], [0], [1], [0, 0, 1, 1], [], []>} : vector<8x128xf32>, vector<128x128xf32>, vector<8x128xf32> -> vector<8x128xf32>
    %25 = vector.broadcast %4 : vector<1x128xf32> to vector<8x128xf32>
    %26 = arith.addf %24, %25 : vector<8x128xf32>
    %c0_23 = arith.constant 0 : index
    %c0_24 = arith.constant 0 : index
    %27 = vector.load %arg10[%c0_23, %c0_24] : memref<8x128xf32, #tpu.memory_space<vmem>>, vector<8x128xf32>
    tpu.vector_store %arg10[%c0_23, %c0_24], %26 {strides = array<i32>} : memref<8x128xf32, #tpu.memory_space<vmem>>, vector<8x128xf32>,
    return
  }
  func.func @transform_0(%arg0: i32) -> (i32, i32) {
    %c0_i32 = arith.constant 0 : i32
    %c0_i32_0 = arith.constant 0 : i32
    return %arg0, %c0_i32 : i32, i32
  }
  func.func @transform_1(%arg0: i32) -> (i32, i32) {
    %c0_i32 = arith.constant 0 : i32
    %c0_i32_0 = arith.constant 0 : i32
    %c0_i32_1 = arith.constant 0 : i32
    return %c0_i32, %c0_i32_0 : i32, i32
  }
  func.func @transform_2(%arg0: i32) -> (i32, i32) {
    %c0_i32 = arith.constant 0 : i32
    %c0_i32_0 = arith.constant 0 : i32
    %c0_i32_1 = arith.constant 0 : i32
    return %c0_i32, %c0_i32_0 : i32, i32
  }
  func.func @transform_3(%arg0: i32) -> (i32, i32) {
    %c0_i32 = arith.constant 0 : i32
    %c0_i32_0 = arith.constant 0 : i32
    %c0_i32_1 = arith.constant 0 : i32
    return %c0_i32, %c0_i32_0 : i32, i32
  }
  func.func @transform_4(%arg0: i32) -> (i32, i32) {
    %c0_i32 = arith.constant 0 : i32
    %c0_i32_0 = arith.constant 0 : i32
    %c0_i32_1 = arith.constant 0 : i32
    return %c0_i32, %c0_i32_0 : i32, i32
  }
  func.func @transform_5(%arg0: i32) -> (i32, i32) {
    %c0_i32 = arith.constant 0 : i32
    %c0_i32_0 = arith.constant 0 : i32
    %c0_i32_1 = arith.constant 0 : i32
    return %c0_i32, %c0_i32_0 : i32, i32
  }
  func.func @transform_6(%arg0: i32) -> (i32, i32) {
    %c0_i32 = arith.constant 0 : i32
    %c0_i32_0 = arith.constant 0 : i32
    %c0_i32_1 = arith.constant 0 : i32
    return %c0_i32, %c0_i32_0 : i32, i32
  }
  func.func @transform_7(%arg0: i32) -> (i32, i32) {
    %c0_i32 = arith.constant 0 : i32
    %c0_i32_0 = arith.constant 0 : i32
    %c0_i32_1 = arith.constant 0 : i32
    return %c0_i32, %c0_i32_0 : i32, i32
  }
  func.func @transform_8(%arg0: i32) -> (i32, i32) {
    %c0_i32 = arith.constant 0 : i32
    %c0_i32_0 = arith.constant 0 : i32
    %c0_i32_1 = arith.constant 0 : i32
    return %c0_i32, %c0_i32_0 : i32, i32
  }
  func.func @transform_9(%arg0: i32) -> (i32, i32) {
    %c0_i32 = arith.constant 0 : i32
    %c0_i32_0 = arith.constant 0 : i32
    return %arg0, %c0_i32 : i32, i32
  }
}

</mosaic_0001>

<llo_original>
// kernel: mlp_forward.1
$region0: #{mlp_forward.1}
  #allocation0 [shape = 'u32[]', space=smem, size = 0x4, offset = 0x4, fixed_abs, tag = 'smem constant byte address 0x4 - core index']
  #allocation1 [shape = 'u32[72,128]{1,0:T(1,128)}', space=vmem, size = 0x9000, scoped, tag = 'internal scratch']
  %s0 = inlined_call_operand.vmem [shape: f32[8,128], index: 0, kind: input, shape index: {}]
  %s1 = inlined_call_operand.vmem [shape: f32[128,128], index: 1, kind: input, shape index: {}]
  %s2 = inlined_call_operand.vmem [shape: f32[1,128], index: 2, kind: input, shape index: {}]
  %s3 = inlined_call_operand.vmem [shape: f32[128,128], index: 3, kind: input, shape index: {}]
  %s4 = inlined_call_operand.vmem [shape: f32[1,128], index: 4, kind: input, shape index: {}]
  %s5 = inlined_call_operand.vmem [shape: f32[128,128], index: 5, kind: input, shape index: {}]
  %s6 = inlined_call_operand.vmem [shape: f32[1,128], index: 6, kind: input, shape index: {}]
  %s7 = inlined_call_operand.vmem [shape: f32[128,128], index: 7, kind: input, shape index: {}]
  %s8 = inlined_call_operand.vmem [shape: f32[1,128], index: 8, kind: input, shape index: {}]
  %s9 = inlined_call_operand.vmem [shape: f32[8,128], index: 9, kind: output, shape index: {}]
  %s10 = sld [smem:[#allocation0]]
  $region46: #{mlp_forward.1} parent=0
    _
  %s12 = ssub.s32 1, %s10
  %s13 = scalar_select 0, %s12, %s10
  // Predicated region
  $region2: #{mlp_forward.1} parent=0 // pred_check
    _
  $region3: #{mlp_forward.1} parent=0 // pred_check_branch
    %15 = sbr.rel (0) target = $region5
  $region4: #{mlp_forward.1} parent=0 // pred_region
    _
  $region5: #{mlp_forward.1} parent=0 // pred_fallthru
    _
  // Predicated region
  $region6: #{mlp_forward.1} parent=0 // pred_check
    _
  $region7: #{mlp_forward.1} parent=0 // pred_check_branch
    %17 = sbr.rel (0) target = $region9
  $region8: #{mlp_forward.1} parent=0 // pred_region
    _
  $region9: #{mlp_forward.1} parent=0 // pred_fallthru
    _
  // Predicated region
  $region10: #{mlp_forward.1} parent=0 // pred_check
    _
  $region11: #{mlp_forward.1} parent=0 // pred_check_branch
    %19 = sbr.rel (0) target = $region13
  $region12: #{mlp_forward.1} parent=0 // pred_region
    _
  $region13: #{mlp_forward.1} parent=0 // pred_fallthru
    _
  // Predicated region
  $region14: #{mlp_forward.1} parent=0 // pred_check
    _
  $region15: #{mlp_forward.1} parent=0 // pred_check_branch
    %21 = sbr.rel (0) target = $region17
  $region16: #{mlp_forward.1} parent=0 // pred_region
    _
  $region17: #{mlp_forward.1} parent=0 // pred_fallthru
    _
  // Predicated region
  $region18: #{mlp_forward.1} parent=0 // pred_check
    _
  $region19: #{mlp_forward.1} parent=0 // pred_check_branch
    %23 = sbr.rel (0) target = $region21
  $region20: #{mlp_forward.1} parent=0 // pred_region
    _
  $region21: #{mlp_forward.1} parent=0 // pred_fallthru
    _
  // Predicated region
  $region22: #{mlp_forward.1} parent=0 // pred_check
    _
  $region23: #{mlp_forward.1} parent=0 // pred_check_branch
    %25 = sbr.rel (0) target = $region25
  $region24: #{mlp_forward.1} parent=0 // pred_region
    _
  $region25: #{mlp_forward.1} parent=0 // pred_fallthru
    _
  // Predicated region
  $region26: #{mlp_forward.1} parent=0 // pred_check
    _
  $region27: #{mlp_forward.1} parent=0 // pred_check_branch
    %27 = sbr.rel (0) target = $region29
  $region28: #{mlp_forward.1} parent=0 // pred_region
    _
  $region29: #{mlp_forward.1} parent=0 // pred_fallthru
    _
  // Predicated region
  $region30: #{mlp_forward.1} parent=0 // pred_check
    _
  $region31: #{mlp_forward.1} parent=0 // pred_check_branch
    %29 = sbr.rel (0) target = $region33
  $region32: #{mlp_forward.1} parent=0 // pred_region
    _
  $region33: #{mlp_forward.1} parent=0 // pred_fallthru
    _
  // Predicated region
  $region34: #{mlp_forward.1} parent=0 // pred_check
    _
  $region35: #{mlp_forward.1} parent=0 // pred_check_branch
    %31 = sbr.rel (0) target = $region37
  $region36: #{mlp_forward.1} parent=0 // pred_region
    _
  $region37: #{mlp_forward.1} parent=0 // pred_fallthru
    _
  %v32 = vld [vmem:[%s0] sm:$0xff]
  %v33 = vld [vmem:[%s2] sm:$0x1]
  %v34 = vld [vmem:[%s4] sm:$0x1]
  %v35 = vld [vmem:[%s6] sm:$0x1]
  %v36 = vld [vmem:[%s8] sm:$0x1]
  %v37 = vld [vmem:[%s1] sm:$0xff]
  %v38 = vld [vmem:[%s1 + $0x8] sm:$0xff]
  %v39 = vld [vmem:[%s1 + $0x10] sm:$0xff]
  %v40 = vld [vmem:[%s1 + $0x18] sm:$0xff]
  %v41 = vld [vmem:[%s1 + $0x20] sm:$0xff]
  %v42 = vld [vmem:[%s1 + $0x28] sm:$0xff]
  %v43 = vld [vmem:[%s1 + $0x30] sm:$0xff]
  %v44 = vld [vmem:[%s1 + $0x38] sm:$0xff]
  %v45 = vld [vmem:[%s1 + $0x40] sm:$0xff]
  %v46 = vld [vmem:[%s1 + $0x48] sm:$0xff]
  %v47 = vld [vmem:[%s1 + $0x50] sm:$0xff]
  %v48 = vld [vmem:[%s1 + $0x58] sm:$0xff]
  %v49 = vld [vmem:[%s1 + $0x60] sm:$0xff]
  %v50 = vld [vmem:[%s1 + $0x68] sm:$0xff]
  %v51 = vld [vmem:[%s1 + $0x70] sm:$0xff]
  %v52 = vld [vmem:[%s1 + $0x78] sm:$0xff]
  %v54 = vperm.slane %v33, 0
  %56 = vmatpush.msra.mxu0 %v52
  %57 = vmatpush.msra.mxu0 %v51
  %58 = vmatpush.msra.mxu0 %v50
  %59 = vmatpush.msra.mxu0 %v49
  %60 = vmatpush.msra.mxu0 %v48
  %61 = vmatpush.msra.mxu0 %v47
  %62 = vmatpush.msra.mxu0 %v46
  %63 = vmatpush.msra.mxu0 %v45
  %64 = vmatpush.msra.mxu0 %v44
  %65 = vmatpush.msra.mxu0 %v43
  %66 = vmatpush.msra.mxu0 %v42
  %67 = vmatpush.msra.mxu0 %v41
  %68 = vmatpush.msra.mxu0 %v40
  %69 = vmatpush.msra.mxu0 %v39
  %70 = vmatpush.msra.mxu0 %v38
  %71 = vmatpush.msra.mxu0 %v37
  %72 = vmatmul.f32.gmra.mxu0 %v32
  %v73 = vpop.f32.mrf.mxu0
  %v74 = vadd.f32 %v54, %v73
  %75 = vdwg.mxu0
  %v76 = vmax.f32 %v74, 0.0
  %v77 = vld [vmem:[%s3] sm:$0xff]
  %v78 = vld [vmem:[%s3 + $0x8] sm:$0xff]
  %v79 = vld [vmem:[%s3 + $0x10] sm:$0xff]
  %v80 = vld [vmem:[%s3 + $0x18] sm:$0xff]
  %v81 = vld [vmem:[%s3 + $0x20] sm:$0xff]
  %v82 = vld [vmem:[%s3 + $0x28] sm:$0xff]
  %v83 = vld [vmem:[%s3 + $0x30] sm:$0xff]
  %v84 = vld [vmem:[%s3 + $0x38] sm:$0xff]
  %v85 = vld [vmem:[%s3 + $0x40] sm:$0xff]
  %v86 = vld [vmem:[%s3 + $0x48] sm:$0xff]
  %v87 = vld [vmem:[%s3 + $0x50] sm:$0xff]
  %v88 = vld [vmem:[%s3 + $0x58] sm:$0xff]
  %v89 = vld [vmem:[%s3 + $0x60] sm:$0xff]
  %v90 = vld [vmem:[%s3 + $0x68] sm:$0xff]
  %v91 = vld [vmem:[%s3 + $0x70] sm:$0xff]
  %v92 = vld [vmem:[%s3 + $0x78] sm:$0xff]
  %v94 = vperm.slane %v34, 0
  %96 = vmatpush.msra.mxu0 %v92
  %97 = vmatpush.msra.mxu0 %v91
  %98 = vmatpush.msra.mxu0 %v90
  %99 = vmatpush.msra.mxu0 %v89
  %100 = vmatpush.msra.mxu0 %v88
  %101 = vmatpush.msra.mxu0 %v87
  %102 = vmatpush.msra.mxu0 %v86
  %103 = vmatpush.msra.mxu0 %v85
  %104 = vmatpush.msra.mxu0 %v84
  %105 = vmatpush.msra.mxu0 %v83
  %106 = vmatpush.msra.mxu0 %v82
  %107 = vmatpush.msra.mxu0 %v81
  %108 = vmatpush.msra.mxu0 %v80
  %109 = vmatpush.msra.mxu0 %v79
  %110 = vmatpush.msra.mxu0 %v78
  %111 = vmatpush.msra.mxu0 %v77
  %112 = vmatmul.f32.gmra.mxu0 %v76
  %v113 = vpop.f32.mrf.mxu0
  %v114 = vadd.f32 %v94, %v113
  %115 = vdwg.mxu0
  %v116 = vmax.f32 %v114, 0.0
  %v117 = vld [vmem:[%s5] sm:$0xff]
  %v118 = vld [vmem:[%s5 + $0x8] sm:$0xff]
  %v119 = vld [vmem:[%s5 + $0x10] sm:$0xff]
  %v120 = vld [vmem:[%s5 + $0x18] sm:$0xff]
  %v121 = vld [vmem:[%s5 + $0x20] sm:$0xff]
  %v122 = vld [vmem:[%s5 + $0x28] sm:$0xff]
  %v123 = vld [vmem:[%s5 + $0x30] sm:$0xff]
  %v124 = vld [vmem:[%s5 + $0x38] sm:$0xff]
  %v125 = vld [vmem:[%s5 + $0x40] sm:$0xff]
  %v126 = vld [vmem:[%s5 + $0x48] sm:$0xff]
  %v127 = vld [vmem:[%s5 + $0x50] sm:$0xff]
  %v128 = vld [vmem:[%s5 + $0x58] sm:$0xff]
  %v129 = vld [vmem:[%s5 + $0x60] sm:$0xff]
  %v130 = vld [vmem:[%s5 + $0x68] sm:$0xff]
  %v131 = vld [vmem:[%s5 + $0x70] sm:$0xff]
  %v132 = vld [vmem:[%s5 + $0x78] sm:$0xff]
  %v134 = vperm.slane %v35, 0
  %136 = vmatpush.msra.mxu0 %v132
  %137 = vmatpush.msra.mxu0 %v131
  %138 = vmatpush.msra.mxu0 %v130
  %139 = vmatpush.msra.mxu0 %v129
  %140 = vmatpush.msra.mxu0 %v128
  %141 = vmatpush.msra.mxu0 %v127
  %142 = vmatpush.msra.mxu0 %v126
  %143 = vmatpush.msra.mxu0 %v125
  %144 = vmatpush.msra.mxu0 %v124
  %145 = vmatpush.msra.mxu0 %v123
  %146 = vmatpush.msra.mxu0 %v122
  %147 = vmatpush.msra.mxu0 %v121
  %148 = vmatpush.msra.mxu0 %v120
  %149 = vmatpush.msra.mxu0 %v119
  %150 = vmatpush.msra.mxu0 %v118
  %151 = vmatpush.msra.mxu0 %v117
  %152 = vmatmul.f32.gmra.mxu0 %v116
  %v153 = vpop.f32.mrf.mxu0
  %v154 = vadd.f32 %v134, %v153
  %155 = vdwg.mxu0
  %v156 = vmax.f32 %v154, 0.0
  %v157 = vld [vmem:[%s7] sm:$0xff]
  %v158 = vld [vmem:[%s7 + $0x8] sm:$0xff]
  %v159 = vld [vmem:[%s7 + $0x10] sm:$0xff]
  %v160 = vld [vmem:[%s7 + $0x18] sm:$0xff]
  %v161 = vld [vmem:[%s7 + $0x20] sm:$0xff]
  %v162 = vld [vmem:[%s7 + $0x28] sm:$0xff]
  %v163 = vld [vmem:[%s7 + $0x30] sm:$0xff]
  %v164 = vld [vmem:[%s7 + $0x38] sm:$0xff]
  %v165 = vld [vmem:[%s7 + $0x40] sm:$0xff]
  %v166 = vld [vmem:[%s7 + $0x48] sm:$0xff]
  %v167 = vld [vmem:[%s7 + $0x50] sm:$0xff]
  %v168 = vld [vmem:[%s7 + $0x58] sm:$0xff]
  %v169 = vld [vmem:[%s7 + $0x60] sm:$0xff]
  %v170 = vld [vmem:[%s7 + $0x68] sm:$0xff]
  %v171 = vld [vmem:[%s7 + $0x70] sm:$0xff]
  %v172 = vld [vmem:[%s7 + $0x78] sm:$0xff]
  %v174 = vperm.slane %v36, 0
  %176 = vmatpush.msra.mxu0 %v172
  %177 = vmatpush.msra.mxu0 %v171
  %178 = vmatpush.msra.mxu0 %v170
  %179 = vmatpush.msra.mxu0 %v169
  %180 = vmatpush.msra.mxu0 %v168
  %181 = vmatpush.msra.mxu0 %v167
  %182 = vmatpush.msra.mxu0 %v166
  %183 = vmatpush.msra.mxu0 %v165
  %184 = vmatpush.msra.mxu0 %v164
  %185 = vmatpush.msra.mxu0 %v163
  %186 = vmatpush.msra.mxu0 %v162
  %187 = vmatpush.msra.mxu0 %v161
  %188 = vmatpush.msra.mxu0 %v160
  %189 = vmatpush.msra.mxu0 %v159
  %190 = vmatpush.msra.mxu0 %v158
  %191 = vmatpush.msra.mxu0 %v157
  %192 = vmatmul.f32.gmra.mxu0 %v156
  %v193 = vpop.f32.mrf.mxu0
  %v194 = vadd.f32 %v174, %v193
  %195 = vdwg.mxu0
  %196 = vst [vmem:[%s9] sm:$0xff] %v194
  // Predicated region
  $region38: #{mlp_forward.1} parent=0 // pred_check
    _
  $region39: #{mlp_forward.1} parent=0 // pred_check_branch
    %198 = sbr.rel (0) target = $region41
  $region40: #{mlp_forward.1} parent=0 // pred_region
    _
  $region41: #{mlp_forward.1} parent=0 // pred_fallthru
    _
  // Predicated region
  $region42: #{mlp_forward.1} parent=0 // pred_check
    _
  $region43: #{mlp_forward.1} parent=0 // pred_check_branch
    %200 = sbr.rel (0) target = $region45
  $region44: #{mlp_forward.1} parent=0 // pred_region
    _
  $region45: #{mlp_forward.1} parent=0 // pred_fallthru
    _

</llo_original>
